<compile_context>
chip_gen: v7x
topology: tpu7x:2x2x1
jax: 0.10.0
libtpu: 0.0.40
codegen_flags: <defaults>
</compile_context>

<pallas_src>
import math

import jax
import jax.numpy as jnp
from jax.experimental import pallas as pl
from jax.experimental.pallas import tpu as pltpu


def padding_shape(kernel_size):
    pad_total = kernel_size - 1
    pad_beg = pad_total // 2
    pad_end = pad_total - pad_beg
    return (pad_beg, pad_end)


def _make_soft_kernel(beta, sign, negate):
    inv_beta = 1.0 / beta
    sb = sign * beta

    def kernel(mw_ref, ew_ref, patch_ref, out_ref):
        # patch_ref: (1, K, TL)   ew_ref: (Op, K)   mw_ref: (Op, 1)
        # out_ref:   (1, Op, TL)
        bp = patch_ref[0].astype(jnp.float32) * sb           # (K, TL)
        mx = jnp.max(bp, axis=0, keepdims=True)              # (1, TL)
        ep = jnp.exp(bp - mx)                                # (K, TL): K*TL exps
        s = jnp.dot(ew_ref[...], ep,
                    preferred_element_type=jnp.float32)      # (Op, TL) on MXU
        res = (jnp.log(s) + mx + mw_ref[...]) * inv_beta     # (Op, TL)
        if negate:
            res = -res
        out_ref[0] = res.astype(out_ref.dtype)

    return kernel


def _make_hard_kernel(K, sign, negate):
    def kernel(w_ref, patch_ref, out_ref):
        sp = patch_ref[0].astype(jnp.float32)                # (K, TL)
        if sign < 0:
            sp = -sp
        w = w_ref[...].astype(jnp.float32)                   # (Op, K)
        acc = w[:, 0:1] + sp[0:1, :]                         # (Op, TL)
        for kk in range(1, K):                               # static unroll
            acc = jnp.maximum(acc, w[:, kk:kk + 1] + sp[kk:kk + 1, :])
        if negate:
            acc = -acc
        out_ref[0] = acc.astype(out_ref.dtype)

    return kernel


def morphology_forward(x, weight, *, limit_val, optype, soft_max=True, beta=15.0):
    """x: (B, C, H, W), weight: (O, C, k, k). Returns (B, O, H, W)."""
    B, C, H, W = x.shape
    O, Cw, k, k2 = weight.shape
    assert C == Cw and k == k2

    if optype == 'erosion2d':
        sign, negate = -1.0, True
    elif optype == 'dilation2d':
        sign, negate = 1.0, False
    else:
        raise ValueError('type should be either erosion2d or dilation2d')

    pb, pe = padding_shape(k)
    K = C * k * k
    L = H * W

    # TODO(synk): fuse the unfold/im2col into the kernel via shifted VMEM slices
    # of the padded image (~k*k less HBM read traffic); kept host-side because
    # the in-kernel (C,H,W)->(C,H*W) relayout with W<128 lanes has no clean
    # Mosaic lowering at these shapes.
    x_pad = jnp.pad(x, ((0, 0), (0, 0), (pb, pe), (pb, pe)),
                    constant_values=limit_val)
    patches = jnp.stack(
        [x_pad[:, :, kh:kh + H, kw:kw + W] for kh in range(k) for kw in range(k)],
        axis=2,
    ).reshape(B, K, L)                         # (B, K, L): L lane-dense
    w2 = weight.reshape(O, K).astype(jnp.float32)

    # Pad the output-channel axis to a sublane multiple.
    Op = ((O + 7) // 8) * 8

    # Spatial tiling: lane-dense tiles, bounded VMEM, second parallel grid axis.
    if L % 128 == 0:
        TL = min(L, 2048)
    else:
        TL = L
    grid = (B, pl.cdiv(L, TL))

    patch_spec = pl.BlockSpec((1, K, TL), lambda b, l: (b, 0, l))
    out_spec = pl.BlockSpec((1, Op, TL), lambda b, l: (b, 0, l))
    out_shape = jax.ShapeDtypeStruct((B, Op, L), x.dtype)
    cparams = pltpu.CompilerParams(
        dimension_semantics=("parallel", "parallel"))

    if soft_max:
        bw = beta * w2                                    # (O, K)
        mw = jnp.max(bw, axis=1, keepdims=True)           # (O, 1)
        ew = jnp.exp(bw - mw)                             # (O, K), tiny host exp
        if Op != O:
            mw = jnp.pad(mw, ((0, Op - O), (0, 0)))
            ew = jnp.pad(ew, ((0, Op - O), (0, 0)), constant_values=1.0)
        kernel = _make_soft_kernel(float(beta), sign, negate)
        out = pl.pallas_call(
            kernel,
            out_shape=out_shape,
            grid=grid,
            in_specs=[
                pl.BlockSpec((Op, 1), lambda b, l: (0, 0)),
                pl.BlockSpec((Op, K), lambda b, l: (0, 0)),
                patch_spec,
            ],
            out_specs=out_spec,
            compiler_params=cparams,
        )(mw, ew, patches)
    else:
        w_in = w2
        if Op != O:
            w_in = jnp.pad(w_in, ((0, Op - O), (0, 0)))
        kernel = _make_hard_kernel(K, sign, negate)
        out = pl.pallas_call(
            kernel,
            out_shape=out_shape,
            grid=grid,
            in_specs=[
                pl.BlockSpec((Op, K), lambda b, l: (0, 0)),
                patch_spec,
            ],
            out_specs=out_spec,
            compiler_params=cparams,
        )(w_in, patches)

    if Op != O:
        out = out[:, :O]
    return out.reshape(B, O, H, W)


def _reference_forward(x, weight, *, limit_val, optype, soft_max=True, beta=15.0):
    """Pure-JAX reference replicating the PyTorch forward exactly."""
    B, C, H, W = x.shape
    O, _, k, _ = weight.shape
    pb, pe = padding_shape(k)
    x_pad = jnp.pad(x, ((0, 0), (0, 0), (pb, pe), (pb, pe)),
                    constant_values=limit_val)
    patches = jnp.stack(
        [x_pad[:, :, kh:kh + H, kw:kw + W] for kh in range(k) for kw in range(k)],
        axis=2,
    ).reshape(B, C * k * k, H * W)                     # (B, K, L)
    w2 = weight.reshape(O, -1)                         # (O, K)
    if optype == 'erosion2d':
        z = w2[None, :, :, None] - patches[:, None, :, :]   # (B, O, K, L)
    else:
        z = w2[None, :, :, None] + patches[:, None, :, :]
    if soft_max:
        res = jax.nn.logsumexp(z * beta, axis=2) / beta
    else:
        res = jnp.max(z, axis=2)
    if optype == 'erosion2d':
        res = -res
    return res.reshape(B, O, H, W)


if __name__ == "__main__":
    # Module config: in_channels=4, out_channels=4, kernel_size=3
    B, C, H, W = 2, 4, 16, 16
    O, k = 4, 3
    limit_val = 0.0
    beta = 15.0

    key = jax.random.PRNGKey(0)
    kx, kw = jax.random.split(key)
    x = jax.random.normal(kx, (B, C, H, W), dtype=jnp.float32)

    # Deterministic kaiming_uniform_(a=sqrt(5)) equivalent: U(-bound, bound),
    # bound = 1/sqrt(fan_in), fan_in = C*k*k.
    fan_in = C * k * k
    bound = 1.0 / math.sqrt(fan_in)
    weight = jax.random.uniform(kw, (O, C, k, k), dtype=jnp.float32,
                                minval=-bound, maxval=bound)

    # Primary path: erosion2d with soft max (module defaults).
    out = morphology_forward(x, weight, limit_val=limit_val, optype='erosion2d',
                             soft_max=True, beta=beta)
    out = jax.block_until_ready(out)
    ref = _reference_forward(x, weight, limit_val=limit_val, optype='erosion2d',
                             soft_max=True, beta=beta)
    assert out.shape == (B, O, H, W)
    assert jnp.allclose(out, ref, atol=1e-3, rtol=1e-3), "soft erosion mismatch"

    # Secondary path: dilation2d with hard max.
    out_h = morphology_forward(x, weight, limit_val=limit_val,
                               optype='dilation2d', soft_max=False, beta=beta)
    out_h = jax.block_until_ready(out_h)
    ref_h = _reference_forward(x, weight, limit_val=limit_val,
                               optype='dilation2d', soft_max=False, beta=beta)
    assert jnp.allclose(out_h, ref_h, atol=1e-5, rtol=1e-5), "hard dilation mismatch"

    print("KERNEL_OK")
</pallas_src>

<mosaic_0001>
module attributes {stable_mosaic.version = 11 : i64} {
  func.func @kernel(%arg0: i32, %arg1: i32, %arg2: memref<8x1xf32, #tpu.memory_space<vmem>>, %arg3: memref<8x36xf32, #tpu.memory_space<vmem>>, %arg4: memref<1x36x256xf32, #tpu.memory_space<vmem>>, %arg5: memref<1x8x256xf32, #tpu.memory_space<vmem>>) attributes {dimension_semantics = [#tpu.dimension_semantics<parallel>, #tpu.dimension_semantics<parallel>], iteration_bounds = array<i64: 2, 1>, scalar_prefetch = 0 : i64, scratch_operands = 0 : i64, tpu.core_type = #tpu.core_type<tc>, window_params = [{pipeline_mode = #tpu.pipeline_mode<synchronous>, transform_indices = @transform_0, window_bounds = array<i64: 8, 1>}, {pipeline_mode = #tpu.pipeline_mode<synchronous>, transform_indices = @transform_1, window_bounds = array<i64: 8, 36>}, {transform_indices = @transform_2, window_bounds = array<i64: 1, 36, 256>}, {transform_indices = @transform_3, window_bounds = array<i64: 1, 8, 256>}]} {
    %c0 = arith.constant 0 : index
    %c0_0 = arith.constant 0 : index
    %c0_1 = arith.constant 0 : index
    %0 = vector.load %arg4[%c0, %c0_0, %c0_1] : memref<1x36x256xf32, #tpu.memory_space<vmem>>, vector<1x36x256xf32>
    %1 = vector.shape_cast %0 : vector<1x36x256xf32> to vector<36x256xf32>
    %cst = arith.constant -1.500000e+01 : f32
    %2 = vector.broadcast %cst : f32 to vector<36x256xf32>
    %3 = arith.mulf %1, %2 : vector<36x256xf32>
    %cst_2 = arith.constant dense<0xFF800000> : vector<256xf32>
    %4 = vector.multi_reduction <maximumf>, %3, %cst_2 [0] : vector<36x256xf32> to vector<256xf32>
    %5 = vector.shape_cast %4 : vector<256xf32> to vector<1x256xf32>
    %6 = vector.broadcast %5 : vector<1x256xf32> to vector<36x256xf32>
    %7 = arith.subf %3, %6 : vector<36x256xf32>
    %8 = math.exp %7 : vector<36x256xf32>
    %c0_3 = arith.constant 0 : index
    %c0_4 = arith.constant 0 : index
    %9 = vector.load %arg3[%c0_3, %c0_4] : memref<8x36xf32, #tpu.memory_space<vmem>>, vector<8x36xf32>
    %cst_5 = arith.constant dense<0.000000e+00> : vector<8x256xf32>
    %10 = tpu.matmul %9, %8, %cst_5 {dimension_numbers = #tpu.dot_dimension_numbers<[1], [0], [0], [1], [0, 0, 1, 1], [], []>} : vector<8x36xf32>, vector<36x256xf32>, vector<8x256xf32> -> vector<8x256xf32>
    %11 = math.log %10 : vector<8x256xf32>
    %12 = vector.broadcast %5 : vector<1x256xf32> to vector<8x256xf32>
    %13 = arith.addf %11, %12 : vector<8x256xf32>
    %c0_6 = arith.constant 0 : index
    %c0_7 = arith.constant 0 : index
    %14 = vector.load %arg2[%c0_6, %c0_7] : memref<8x1xf32, #tpu.memory_space<vmem>>, vector<8x1xf32>
    %15 = vector.broadcast %14 : vector<8x1xf32> to vector<8x256xf32>
    %16 = arith.addf %13, %15 : vector<8x256xf32>
    %cst_8 = arith.constant 0.0666666701 : f32
    %17 = vector.broadcast %cst_8 : f32 to vector<8x256xf32>
    %18 = arith.mulf %16, %17 : vector<8x256xf32>
    %cst_9 = arith.constant 0.000000e+00 : f32
    %19 = vector.broadcast %cst_9 : f32 to vector<8x256xf32>
    %20 = arith.subf %19, %18 : vector<8x256xf32>
    %c0_10 = arith.constant 0 : index
    %c0_11 = arith.constant 0 : index
    %c0_12 = arith.constant 0 : index
    %21 = vector.load %arg5[%c0_10, %c0_11, %c0_12] : memref<1x8x256xf32, #tpu.memory_space<vmem>>, vector<1x8x256xf32>
    %22 = vector.shape_cast %21 : vector<1x8x256xf32> to vector<8x256xf32>
    %23 = vector.shape_cast %20 : vector<8x256xf32> to vector<1x8x256xf32>
    tpu.vector_store %arg5[%c0_10, %c0_11, %c0_12], %23 {strides = array<i32>} : memref<1x8x256xf32, #tpu.memory_space<vmem>>, vector<1x8x256xf32>,
    return
  }
  func.func @transform_0(%arg0: i32, %arg1: i32) -> (i32, i32) {
    %c0_i32 = arith.constant 0 : i32
    %c0_i32_0 = arith.constant 0 : i32
    %c0_i32_1 = arith.constant 0 : i32
    return %c0_i32, %c0_i32_0 : i32, i32
  }
  func.func @transform_1(%arg0: i32, %arg1: i32) -> (i32, i32) {
    %c0_i32 = arith.constant 0 : i32
    %c0_i32_0 = arith.constant 0 : i32
    %c0_i32_1 = arith.constant 0 : i32
    return %c0_i32, %c0_i32_0 : i32, i32
  }
  func.func @transform_2(%arg0: i32, %arg1: i32) -> (i32, i32, i32) {
    %c0_i32 = arith.constant 0 : i32
    %c0_i32_0 = arith.constant 0 : i32
    return %arg0, %c0_i32, %arg1 : i32, i32, i32
  }
  func.func @transform_3(%arg0: i32, %arg1: i32) -> (i32, i32, i32) {
    %c0_i32 = arith.constant 0 : i32
    %c0_i32_0 = arith.constant 0 : i32
    return %arg0, %c0_i32, %arg1 : i32, i32, i32
  }
}

</mosaic_0001>

<llo_original>
// kernel: tpu_custom_call.1
$region0: #{tpu_custom_call.1}
  #allocation0 [shape = 'u32[]', space=smem, size = 0x4, offset = 0x4, fixed_abs, tag = 'smem constant byte address 0x4 - core index']
  #allocation1 [shape = 'u32[144,128]{1,0:T(1,128)}', space=vmem, size = 0x12000, scoped, tag = 'internal scratch']
  %s0 = inlined_call_operand.vmem [shape: f32[8,1], index: 0, kind: input, shape index: {}]
  %s1 = inlined_call_operand.vmem [shape: f32[8,36], index: 1, kind: input, shape index: {}]
  %s2 = inlined_call_operand.vmem [shape: f32[2,36,256], index: 2, kind: input, shape index: {}]
  %s3 = inlined_call_operand.hbm [shape: f32[2,8,256], index: 3, kind: output, shape index: {}]
  %s4 = sld [smem:[#allocation0]]
  $region45: #{tpu_custom_call.1} parent=0
    _
  %s6 = ssub.s32 1, %s4
  %s7 = scalar_select 0, %s6, %s4
  $region1: #{tpu_custom_call.1} parent=0
    #allocation2 [shape = 'u8[16384]{0}', space=vmem, size = 0x4000, scoped, tag = 'output window, operand 0']
    #allocation3 [shape = 's32[2]{0}', space=sflag, size = 0x8, scoped, tag = 'scoped memory for tpu_custom_call.1']
    %8 = vsyncpa [#allocation3], 0
    %s9 = scalar_lea.sflag [#allocation3], 1
    %10 = vsyncpa %s9, 0
    loop: start=0, step=1, limit=4
    $region2: #{tpu_custom_call.1} parent=1 // loop_pre_header
      _
    $region3: #{tpu_custom_call.1} parent=1 // loop_header
      %s12 = sphi 0, %s16
      %p13 = scmp.ge.s32.totalorder %s12, 4
      %s19 = sphi 0, %s31
      %s20 = sphi 0, %s27
      %s21 = sphi 0, %s19
      %s22 = sphi 0, %s20
      %s23 = sphi 0, %s21
      %s24 = sphi 0, %s22
      %s32 = sphi 0, %s32
      %s34 = sphi 0, %s32
      %s35 = sphi 0, %s34
      %s49 = sphi 0, %s35
      %s53 = sphi 0, %s53
      %s55 = sphi 0, %s53
      %s56 = sphi 0, %s55
      %s70 = sphi 0, %s56
      %s78 = sphi 0, %s80
      %s81 = sphi 0, %s78
      %s82 = sphi 0, %s81
      %s98 = sphi 0, %s82
      %s106 = sphi 0, %s108
      %s109 = sphi 0, %s106
      %s110 = sphi 0, %s109
      %s126 = sphi 0, %s110
    $region4: #{tpu_custom_call.1} parent=1 // loop_header_branch
      %15 = sbr.rel (%p13) target = $region8
    $region5: #{tpu_custom_call.1} parent=1 // loop_body
      %s17 = ssub.s32 %s12, 1
      %s18 = ssub.s32 %s12, 2
      %s25 = sadd.s32 1, %s20
      %p26 = scmp.ge.s32.totalorder %s25, 1
      %s27 = scalar_select %p26, 0, %s25
      %s28 = sadd.s32 1, %s19
      %s29 = scalar_select %p26, %s28, %s19
      %p30 = scmp.ge.s32.totalorder %s29, 2
      %s31 = scalar_select %p30, 0, %s29
      %s33 = sadd.s32 %s32, 1
      %p36 = scmp.eq.s32.totalorder %s12, 1
      %p37 = scmp.ne.s32.totalorder %s32, %s34
      %p38 = scmp.eq.s32.totalorder %s12, 0
      %p39 = por %p37, %p38
      %p40 = scmp.ne.s32.totalorder %s32, %s34
      %p41 = scmp.eq.s32.totalorder %s17, 1
      %p42 = por %p40, %p41
      %p43 = scmp.ne.s32.totalorder %s34, %s35
      %p44 = scmp.eq.s32.totalorder %s17, 0
      %p45 = por %p43, %p44
      %p46 = scmp.ne.s32.totalorder %s34, %s35
      %p47 = scmp.eq.s32.totalorder %s18, 1
      %p48 = por %p46, %p47
      %p50 = scmp.ne.s32.totalorder %s35, %s49
      %p51 = scmp.eq.s32.totalorder %s18, 0
      %p52 = por %p50, %p51
      %s54 = sadd.s32 %s53, 1
      %p57 = scmp.eq.s32.totalorder %s12, 1
      %p58 = scmp.ne.s32.totalorder %s53, %s55
      %p59 = scmp.eq.s32.totalorder %s12, 0
      %p60 = por %p58, %p59
      %p61 = scmp.ne.s32.totalorder %s53, %s55
      %p62 = scmp.eq.s32.totalorder %s17, 1
      %p63 = por %p61, %p62
      %p64 = scmp.ne.s32.totalorder %s55, %s56
      %p65 = scmp.eq.s32.totalorder %s17, 0
      %p66 = por %p64, %p65
      %p67 = scmp.ne.s32.totalorder %s55, %s56
      %p68 = scmp.eq.s32.totalorder %s18, 1
      %p69 = por %p67, %p68
      %p71 = scmp.ne.s32.totalorder %s56, %s70
      %p72 = scmp.eq.s32.totalorder %s18, 0
      %p73 = por %p71, %p72
      %s74 = ssub.s32 %s19, %s31
      %s75 = ssub.s32 %s20, %s27
      %s76 = sor.u32 %s74, %s75
      %p77 = scmp.eq.s32.totalorder %s76, 0
      %s79 = sadd.s32 %s78, 1
      %s80 = scalar_select %p77, %s78, %s79
      %p83 = pneg %p77
      %p84 = scmp.eq.s32.totalorder %s12, 1
      %p85 = por %p83, %p84
      %p86 = scmp.ne.s32.totalorder %s78, %s81
      %p87 = scmp.eq.s32.totalorder %s12, 0
      %p88 = por %p86, %p87
      %p89 = scmp.ne.s32.totalorder %s78, %s81
      %p90 = scmp.eq.s32.totalorder %s17, 1
      %p91 = por %p89, %p90
      %p92 = scmp.ne.s32.totalorder %s81, %s82
      %p93 = scmp.eq.s32.totalorder %s17, 0
      %p94 = por %p92, %p93
      %p95 = scmp.ne.s32.totalorder %s81, %s82
      %p96 = scmp.eq.s32.totalorder %s18, 1
      %p97 = por %p95, %p96
      %p99 = scmp.ne.s32.totalorder %s82, %s98
      %p100 = scmp.eq.s32.totalorder %s18, 0
      %p101 = por %p99, %p100
      %s102 = ssub.s32 %s19, %s31
      %s103 = ssub.s32 %s20, %s27
      %s104 = sor.u32 %s102, %s103
      %p105 = scmp.eq.s32.totalorder %s104, 0
      %s107 = sadd.s32 %s106, 1
      %s108 = scalar_select %p105, %s106, %s107
      %p111 = pneg %p105
      %p112 = scmp.eq.s32.totalorder %s12, 1
      %p113 = por %p111, %p112
      %p114 = scmp.ne.s32.totalorder %s106, %s109
      %p115 = scmp.eq.s32.totalorder %s12, 0
      %p116 = por %p114, %p115
      %p117 = scmp.ne.s32.totalorder %s106, %s109
      %p118 = scmp.eq.s32.totalorder %s17, 1
      %p119 = por %p117, %p118
      %p120 = scmp.ne.s32.totalorder %s109, %s110
      %p121 = scmp.eq.s32.totalorder %s17, 0
      %p122 = por %p120, %p121
      %p123 = scmp.ne.s32.totalorder %s109, %s110
      %p124 = scmp.eq.s32.totalorder %s18, 1
      %p125 = por %p123, %p124
      %p127 = scmp.ne.s32.totalorder %s110, %s126
      %p128 = scmp.eq.s32.totalorder %s18, 0
      %p129 = por %p127, %p128
      %p130 = scmp.le.s32.totalorder 1, %s12
      %p131 = scmp.lt.s32.totalorder %s12, 3
      %p132 = pnand %p130, %p131
      %p133 = pneg %p132
      // Predicated region
      $region9: #{tpu_custom_call.1} parent=5 // pred_check
        _
      $region10: #{tpu_custom_call.1} parent=5 // pred_check_branch
        %135 = sbr.rel (%p132) target = $region12
      $region11: #{tpu_custom_call.1} parent=5 // pred_region
        %s136 = ssub.s32 %s12, 1
        // Predicated region
        $region13: #{tpu_custom_call.1} parent=11 // pred_check
          %p137 = pneg %p45
        $region14: #{tpu_custom_call.1} parent=11 // pred_check_branch
          %139 = sbr.rel (%p137) target = $region16
        $region15: #{tpu_custom_call.1} parent=11 // pred_region
          _
        $region16: #{tpu_custom_call.1} parent=11 // pred_fallthru
          _
        // Predicated region
        $region17: #{tpu_custom_call.1} parent=11 // pred_check
          %p140 = pneg %p66
        $region18: #{tpu_custom_call.1} parent=11 // pred_check_branch
          %142 = sbr.rel (%p140) target = $region20
        $region19: #{tpu_custom_call.1} parent=11 // pred_region
          _
        $region20: #{tpu_custom_call.1} parent=11 // pred_fallthru
          _
      $region12: #{tpu_custom_call.1} parent=5 // pred_fallthru
        _
      %p143 = scmp.lt.s32.totalorder %s12, 2
      // Predicated region
      $region21: #{tpu_custom_call.1} parent=5 // pred_check
        %p144 = pneg %p143
      $region22: #{tpu_custom_call.1} parent=5 // pred_check_branch
        %146 = sbr.rel (%p144) target = $region24
      $region23: #{tpu_custom_call.1} parent=5 // pred_region
        // Predicated region
        $region25: #{tpu_custom_call.1} parent=23 // pred_check
          %p147 = pneg %p88
        $region26: #{tpu_custom_call.1} parent=23 // pred_check_branch
          %149 = sbr.rel (%p147) target = $region28
        $region27: #{tpu_custom_call.1} parent=23 // pred_region
          %s150 = smul.u32 2, %s20
          %p151 = scmp.lt.s32.totalorder %s19, 1
          %s152 = scalar_select %p151, %s19, 1
          %p153 = scmp.lt.s32.totalorder %s150, 1
          %s154 = scalar_select %p153, %s150, 1
          %s155 = smul.addr %s152, 10
          %s156 = sadd.s32 %s154, %s155
          %s157 = smul.addr %s156, 8
          %s158 = scalar_lea.vmem %s2, %s157
          %s159 = smul.u32 2, %s20
        $region28: #{tpu_custom_call.1} parent=23 // pred_fallthru
          _
      $region24: #{tpu_custom_call.1} parent=5 // pred_fallthru
        _
      %p160 = scmp.le.s32.totalorder 1, %s12
      %p161 = scmp.lt.s32.totalorder %s12, 3
      %p162 = pnand %p160, %p161
      %p163 = pneg %p162
      // Predicated region
      $region29: #{tpu_custom_call.1} parent=5 // pred_check
        _
      $region30: #{tpu_custom_call.1} parent=5 // pred_check_branch
        %165 = sbr.rel (%p162) target = $region32
      $region31: #{tpu_custom_call.1} parent=5 // pred_region
        %s166 = ssub.s32 %s12, 1
        %p167 = pneg %p45
        %p168 = pneg %p42
        %p169 = pneg %p66
        %p170 = pneg %p63
        %s171 = smul.u32 2, %s22
        %p172 = scmp.lt.s32.totalorder %s21, 1
        %s173 = scalar_select %p172, %s21, 1
        %p174 = scmp.lt.s32.totalorder %s171, 1
        %s175 = scalar_select %p174, %s171, 1
        %s176 = smul.addr %s173, 10
        %s177 = sadd.s32 %s175, %s176
        %s178 = smul.addr %s177, 8
        %s179 = scalar_lea.vmem %s2, %s178
        %p180 = pneg %p94
        %p181 = pneg %p91
        %p182 = pneg %p122
        %p183 = pneg %p119
        %s184 = sand.u32 %s109, 1
        %s185 = scalar_lea.sflag [#allocation3], %s184
        %s186 = sand.u32 %s109, 1
        %s187 = smul.addr %s186, 16
        %s188 = scalar_lea.vmem [#allocation2], %s187
        %s189 = smul.u32 2, %s22
        %p190 = scmp.lt.s32.totalorder %s21, 1
        %s191 = scalar_select %p190, %s21, 1
        %p192 = scmp.lt.s32.totalorder %s189, 1
        %s193 = scalar_select %p192, %s189, 1
        %s194 = smul.addr %s191, 10
        %s195 = sadd.s32 %s193, %s194
        %s196 = smul.addr %s195, 8
        %s197 = scalar_lea.vmem %s2, %s196
        %s198 = smul.u32 2, %s22
        %s199 = smul.u32 2, %s22
        %v200 = vld [vmem:[%s197] sm:$0xff]
        %v201 = vld [vmem:[%s197 + $0x8] sm:$0xff]
        %v202 = vld [vmem:[%s197 + $0x10] sm:$0xff]
        %v203 = vld [vmem:[%s197 + $0x18] sm:$0xff]
        %v204 = vld [vmem:[%s197 + $0x20] sm:$0xff]
        %v205 = vld [vmem:[%s197 + $0x28] sm:$0xff]
        %v206 = vld [vmem:[%s197 + $0x30] sm:$0xff]
        %v207 = vld [vmem:[%s197 + $0x38] sm:$0xff]
        %v208 = vld [vmem:[%s197 + $0x40] sm:$0xf]
        %v209 = vld [vmem:[%s197 + $0x48] sm:$0xf]
        %v210 = vmul.f32 %v200, -15.0
        %v211 = vmul.f32 %v201, -15.0
        %v212 = vmul.f32 %v202, -15.0
        %v213 = vmul.f32 %v203, -15.0
        %v214 = vmul.f32 %v204, -15.0
        %v215 = vmul.f32 %v205, -15.0
        %v216 = vmul.f32 %v206, -15.0
        %v217 = vmul.f32 %v207, -15.0
        %v218 = vmul.f32 %v208, -15.0
        %v219 = vmul.f32 %v209, -15.0
        %v220 = vmax.f32 %v210, %v214
        %v221 = vmax.f32 %v212, %v216
        %vm222 = vcmask 1043456
        %v223 = vsel %vm222, %v218, -inf
        %v224 = vmax.f32 %v220, %v223
        %v225 = vmax.f32 %v224, %v221
        %v226 = vrot.slane %v225, 4
        %v227 = vmax.f32 %v225, %v226
        %v228 = vrot.slane %v227, 2
        %v229 = vmax.f32 %v227, %v228
        %v230 = vrot.slane %v229, 1
        %v231 = vmax.f32 %v229, %v230
        %v232 = vmax.f32 %v211, %v215
        %v233 = vmax.f32 %v213, %v217
        %v234 = vsel %vm222, %v219, -inf
        %v235 = vmax.f32 %v232, %v234
        %v236 = vmax.f32 %v235, %v233
        %v237 = vrot.slane %v236, 4
        %v238 = vmax.f32 %v236, %v237
        %v239 = vrot.slane %v238, 2
        %v240 = vmax.f32 %v238, %v239
        %v241 = vrot.slane %v240, 1
        %v242 = vmax.f32 %v240, %v241
        %v243 = vsub.f32 %v210, %v231
        %v244 = vsub.f32 %v211, %v242
        %v245 = vsub.f32 %v212, %v231
        %v246 = vsub.f32 %v213, %v242
        %v247 = vsub.f32 %v214, %v231
        %v248 = vsub.f32 %v215, %v242
        %v249 = vsub.f32 %v216, %v231
        %v250 = vsub.f32 %v217, %v242
        %v251 = vsub.f32 %v218, %v231
        %v252 = vsub.f32 %v219, %v242
        %v253 = vmul.f32 %v243, 1.442695
        %v254 = vpow.pop %v253
        %v255 = vmul.f32 %v244, 1.442695
        %v256 = vpow.pop %v255
        %v257 = vmul.f32 %v245, 1.442695
        %v258 = vpow.pop %v257
        %v259 = vmul.f32 %v246, 1.442695
        %v260 = vpow.pop %v259
        %v261 = vmul.f32 %v247, 1.442695
        %v262 = vpow.pop %v261
        %v263 = vmul.f32 %v248, 1.442695
        %v264 = vpow.pop %v263
        %v265 = vmul.f32 %v249, 1.442695
        %v266 = vpow.pop %v265
        %v267 = vmul.f32 %v250, 1.442695
        %v268 = vpow.pop %v267
        %v269 = vmul.f32 %v251, 1.442695
        %v270 = vpow.pop %v269
        %v271 = vmul.f32 %v252, 1.442695
        %v272 = vpow.pop %v271
        %v273 = vld [vmem:[%s1] sm:$0xff]
        %vm274 = vcmask 293888
        %v276 = vsel %vm274, %v273, 0
        %v279 = vsel %vm222, %v270, 0
        %v282 = vsel %vm222, %v272, 0
        %284 = vmatprep.subr.mxu0 %v256
        %285 = vmatpush1.msra.mxu0 %v254
        %286 = vmatprep.subr.mxu0 %v260
        %287 = vmatpush1.msra.mxu0 %v258
        %288 = vmatprep.subr.mxu0 %v264
        %289 = vmatpush1.msra.mxu0 %v262
        %290 = vmatprep.subr.mxu0 %v268
        %291 = vmatpush1.msra.mxu0 %v266
        %292 = vmatprep.subr.mxu0 %v282
        %293 = vmatpush1.msra.mxu0 %v279
        %294 = vmatprep.subr.mxu0 0.0
        %295 = vmatpush1.msra.mxu0 0.0
        %296 = vmatprep.subr.mxu0 0.0
        %297 = vmatpush1.msra.mxu0 0.0
        %298 = vmatprep.subr.mxu0 0.0
        %299 = vmatpush1.msra.mxu0 0.0
        %300 = vmatprep.subr.mxu0 0.0
        %301 = vmatpush1.msra.mxu0 0.0
        %302 = vmatprep.subr.mxu0 0.0
        %303 = vmatpush1.msra.mxu0 0.0
        %304 = vmatprep.subr.mxu0 0.0
        %305 = vmatpush1.msra.mxu0 0.0
        %306 = vmatprep.subr.mxu0 0.0
        %307 = vmatpush1.msra.mxu0 0.0
        %308 = vmatprep.subr.mxu0 0.0
        %309 = vmatpush1.msra.mxu0 0.0
        %310 = vmatprep.subr.mxu0 0.0
        %311 = vmatpush1.msra.mxu0 0.0
        %312 = vmatprep.subr.mxu0 0.0
        %313 = vmatpush1.msra.mxu0 0.0
        %314 = vmatprep.subr.mxu0 0.0
        %315 = vmatpush1.msra.mxu0 0.0
        %316 = vmatprep.subr.mxu0 0.0
        %317 = vmatpush1.msra.mxu0 0.0
        %318 = vmatprep.subr.mxu0 0.0
        %319 = vmatpush1.msra.mxu0 0.0
        %320 = vmatprep.subr.mxu0 0.0
        %321 = vmatpush1.msra.mxu0 0.0
        %322 = vmatprep.subr.mxu0 0.0
        %323 = vmatpush1.msra.mxu0 0.0
        %324 = vmatprep.subr.mxu0 0.0
        %325 = vmatpush1.msra.mxu0 0.0
        %326 = vmatprep.subr.mxu0 0.0
        %327 = vmatpush1.msra.mxu0 0.0
        %328 = vmatprep.subr.mxu0 0.0
        %329 = vmatpush1.msra.mxu0 0.0
        %330 = vmatprep.subr.mxu0 0.0
        %331 = vmatpush1.msra.mxu0 0.0
        %332 = vmatprep.subr.mxu0 0.0
        %333 = vmatpush1.msra.mxu0 0.0
        %334 = vmatprep.subr.mxu0 0.0
        %335 = vmatpush1.msra.mxu0 0.0
        %336 = vmatprep.subr.mxu0 0.0
        %337 = vmatpush1.msra.mxu0 0.0
        %338 = vmatprep.subr.mxu0 0.0
        %339 = vmatpush1.msra.mxu0 0.0
        %340 = vmatprep.subr.mxu0 0.0
        %341 = vmatpush1.msra.mxu0 0.0
        %342 = vmatprep.subr.mxu0 0.0
        %343 = vmatpush1.msra.mxu0 0.0
        %344 = vmatprep.subr.mxu0 0.0
        %345 = vmatpush1.msra.mxu0 0.0
        %346 = vmatprep.subr.mxu0 0.0
        %347 = vmatpush1.msra.mxu0 0.0
        %348 = vmatprep.mubr.f32.mxu0 0.0
        %349 = vmatmul.mubr.f32.gmra.mrb[0].mxu0 %v276
        %v350 = vpop.f32.mrb[0].mxu0
        %v351 = vadd.f32 0.0, %v350
        %v352 = vpop.f32.mrb[0].mxu0
        %v353 = vadd.f32 0.0, %v352
        %354 = vdwg.mxu0
        %v355 = vlog2.pop %v351
        %v356 = vmul.f32 %v355, 0.6931472
        %v357 = vlog2.pop %v353
        %v358 = vmul.f32 %v357, 0.6931472
        %v359 = vadd.f32 %v356, %v231
        %v360 = vadd.f32 %v358, %v242
        %v361 = vld [vmem:[%s0] sm:$0xff]
        %363 = vset.pattern.permute.xlu0 0
        %364 = vperm.xlu0 %363, %v361
        %v365 = vpop.permute.xlu0 %364
        %v367 = vadd.f32 %v359, %v365
        %v368 = vadd.f32 %v360, %v365
        %v369 = vmul.f32 %v367, 0.06666667
        %v370 = vmul.f32 %v368, 0.06666667
        %v371 = vsub.f32 0.0, %v369
        %v372 = vsub.f32 0.0, %v370
        %373 = vst [vmem:[%s188] sm:$0xff] %v371
        %374 = vst [vmem:[%s188 + $0x8] sm:$0xff] %v372
        %s375 = sand.u32 %s109, 1
        %s376 = scalar_lea.sflag [#allocation3], %s375
        %s377 = sand.u32 %s109, 1
        %s378 = smul.addr %s377, 16
        %s379 = scalar_lea.vmem [#allocation2], %s378
        // Predicated region
        $region33: #{tpu_custom_call.1} parent=31 // pred_check
          %p380 = pneg %p119
        $region34: #{tpu_custom_call.1} parent=31 // pred_check_branch
          %382 = sbr.rel (%p380) target = $region36
        $region35: #{tpu_custom_call.1} parent=31 // pred_region
          %s383 = smul.u32 2, %s22
          %s385 = ssub.s32 256, 256
          %386 = vsyncadd %s376, %s385
          %s387 = smul.addr %s21, 2
          %s388 = sadd.s32 %s383, %s387
          %s389 = smul.addr %s388, 128
          %s390 = scalar_lea.hbm %s3, %s389
          %s392 = sshll.u32 %s379, 4
          %s393 = int_to_ptr.vmem [resolvable:$true] %s392
          %395 = dma.vmem_to_hbm [thread:$0]  %s393, 256, %s390, %s376
        $region36: #{tpu_custom_call.1} parent=31 // pred_fallthru
          _
      $region32: #{tpu_custom_call.1} parent=5 // pred_fallthru
        _
      %p396 = scmp.le.s32.totalorder 2, %s12
      // Predicated region
      $region37: #{tpu_custom_call.1} parent=5 // pred_check
        %p397 = pneg %p396
      $region38: #{tpu_custom_call.1} parent=5 // pred_check_branch
        %399 = sbr.rel (%p397) target = $region40
      $region39: #{tpu_custom_call.1} parent=5 // pred_region
        %s400 = ssub.s32 %s12, 2
        // Predicated region
        $region41: #{tpu_custom_call.1} parent=39 // pred_check
          %p401 = pneg %p125
        $region42: #{tpu_custom_call.1} parent=39 // pred_check_branch
          %403 = sbr.rel (%p401) target = $region44
        $region43: #{tpu_custom_call.1} parent=39 // pred_region
          %s404 = sand.u32 %s110, 1
          %s405 = scalar_lea.sflag [#allocation3], %s404
          %s406 = sand.u32 %s110, 1
          %s407 = smul.addr %s406, 16
          %s408 = scalar_lea.vmem [#allocation2], %s407
          %409 = dma.done %s405, 256
        $region44: #{tpu_custom_call.1} parent=39 // pred_fallthru
          _
      $region40: #{tpu_custom_call.1} parent=5 // pred_fallthru
        _
    $region6: #{tpu_custom_call.1} parent=1 // loop_footer
      %s16 = sadd.s32 1, %s12
    $region7: #{tpu_custom_call.1} parent=1 // loop_footer_branch
      %11 = sbr.rel target = $region3
    $region8: #{tpu_custom_call.1} parent=1 // loop_exit
      _
    %410 = vsyncpa [#allocation3], 1
    %s411 = scalar_lea.sflag [#allocation3], 1
    %412 = vsyncpa %s411, 1

</llo_original>
